<compile_context>
chip_gen: v7x
topology: tpu7x:2x2x1
jax: 0.10.0
libtpu: 0.0.40
codegen_flags: <defaults>
</compile_context>

<pallas_src>
import functools

import jax
import jax.numpy as jnp
from jax import lax
from jax.experimental import pallas as pl
from jax.experimental.pallas import tpu as pltpu

EPS = 1e-5
LANE = 128


# --------------------------------------------------------------------------
# small helpers
# --------------------------------------------------------------------------
def _round_up(x, m):
    return (x + m - 1) // m * m


@functools.lru_cache(maxsize=None)
def _vmem_cap_bytes():
    """Per-call VMEM cap: 3/4 of physical VMEM (leaves compiler headroom on v7x,
    uses the extra capacity on v5e/v6e).  Conservative 48 MiB fallback."""
    phys = 64 << 20
    try:
        info = pltpu.get_tpu_info()
        phys = int(getattr(info, "vmem_capacity_bytes", phys))
    except Exception:
        pass
    return max(32 << 20, (phys * 3) // 4)


def _choose_tile_m(m, bytes_per_row):
    """Largest row tile (<= 4096) fitting the VMEM budget; prefer exact divisors
    of m so no row padding / output slicing is needed (review #3/#8)."""
    budget = _vmem_cap_bytes() // 3            # room for double buffering + weights
    cap = max(8, min(4096, budget // max(1, int(bytes_per_row))))
    cap -= cap % 8
    cap = max(cap, 8)
    if m <= cap:
        return m, m                            # single block (full-dim block is legal)
    for t in range(cap, 7, -8):
        if m % t == 0:
            return t, m
    t = cap                                    # fallback: pad rows and slice later
    return t, _round_up(m, t)


def _compiler_params(semantics, *block_bytes):
    cap = _vmem_cap_bytes()
    need = 2 * sum(int(b) for b in block_bytes) + (8 << 20)
    return pltpu.CompilerParams(dimension_semantics=semantics,
                                vmem_limit_bytes=int(min(max(need, 32 << 20), cap)))


def _pad_rows(p, m_pad):
    m = p.shape[0]
    return p if m == m_pad else jnp.pad(p, ((0, m_pad - m), (0, 0)))


# --------------------------------------------------------------------------
# Pallas kernels
# --------------------------------------------------------------------------
def _matmul_stats_kernel(p_ref, w_ref, y_ref, stats_ref):
    """Pass A: one M-tile of y = P @ W (bf16 in, f32 acc, bf16 out) plus exact f32
    per-channel sum / sum-of-squares accumulated into a resident (8, Cp) block
    (rows 0/1 = sum/sumsq, rows 2..7 = sublane alignment padding)."""
    y = jnp.dot(p_ref[...], w_ref[...], preferred_element_type=jnp.float32)
    y_ref[...] = y.astype(y_ref.dtype)
    s = jnp.sum(y, axis=0, keepdims=True)          # exact f32 reduce (correctness #1)
    ss = jnp.sum(y * y, axis=0, keepdims=True)
    st = jnp.concatenate([s, ss, jnp.zeros((6, s.shape[1]), jnp.float32)], axis=0)

    @pl.when(pl.program_id(1) == 0)
    def _():
        stats_ref[...] = st

    @pl.when(pl.program_id(1) != 0)
    def _():
        stats_ref[...] += st


def _affine_act_kernel(*refs, act, has_res):
    """Pass B: out = act(y * scale + shift [+ residual]); bf16 in/out, f32 math."""
    if has_res:
        y_ref, s_ref, b_ref, r_ref, o_ref = refs
    else:
        y_ref, s_ref, b_ref, o_ref = refs
    y = y_ref[...].astype(jnp.float32) * s_ref[...] + b_ref[...]
    if has_res:
        y = y + r_ref[...].astype(jnp.float32)
    y = jnp.maximum(y, 0.0) if act == "relu" else jnp.tanh(y)
    o_ref[...] = y.astype(o_ref.dtype)


def _matmul_bias_tanh_kernel(p_ref, w_ref, b_ref, o_ref):
    """Final conv (no BN): fused matmul + bias + tanh, bf16 output."""
    y = jnp.dot(p_ref[...], w_ref[...], preferred_element_type=jnp.float32)
    o_ref[...] = jnp.tanh(y + b_ref[...]).astype(o_ref.dtype)


# --------------------------------------------------------------------------
# pallas_call wrappers
# --------------------------------------------------------------------------
def matmul_with_stats(patches, w, tile_m, m_pad):
    """patches (m_pad, K) bf16 (zero-padded rows), w (K, Cp) bf16 ->
       (y (m_pad, Cp) bf16, stats (2, Cp) f32 = [col sums; col sumsq])."""
    kdim = patches.shape[1]
    cp = w.shape[1]
    n_tiles = m_pad // tile_m
    # 2-way "parallel" outer split so v7x's two TensorCores share pass A (review #4).
    split = 2 if (n_tiles >= 2 and n_tiles % 2 == 0) else 1
    tpc = n_tiles // split
    y, stats = pl.pallas_call(
        _matmul_stats_kernel,
        out_shape=(jax.ShapeDtypeStruct((m_pad, cp), jnp.bfloat16),
                   jax.ShapeDtypeStruct((8 * split, cp), jnp.float32)),
        grid=(split, tpc),
        in_specs=[pl.BlockSpec((tile_m, kdim), lambda c, i: (c * tpc + i, 0)),
                  pl.BlockSpec((kdim, cp), lambda c, i: (0, 0))],      # resident weight
        out_specs=(pl.BlockSpec((tile_m, cp), lambda c, i: (c * tpc + i, 0)),
                   pl.BlockSpec((8, cp), lambda c, i: (c, 0))),        # per-core stats acc
        compiler_params=_compiler_params(
            ("parallel", "arbitrary"),
            tile_m * kdim * 2, kdim * cp * 2, tile_m * cp * 2, 8 * cp * 4),
    )(patches, w)
    stats = stats.reshape(split, 8, cp)[:, :2, :].sum(axis=0)          # reduce partials
    return y, stats


def affine_act(y, scale, shift, tile_m, act, residual=None):
    m_pad, cp = y.shape
    has_res = residual is not None
    kernel = functools.partial(_affine_act_kernel, act=act, has_res=has_res)
    in_specs = [pl.BlockSpec((tile_m, cp), lambda i: (i, 0)),
                pl.BlockSpec((1, cp), lambda i: (0, 0)),
                pl.BlockSpec((1, cp), lambda i: (0, 0))]
    args = [y, scale, shift]
    if has_res:
        in_specs.append(pl.BlockSpec((tile_m, cp), lambda i: (i, 0)))
        args.append(residual)
    return pl.pallas_call(
        kernel,
        out_shape=jax.ShapeDtypeStruct((m_pad, cp), jnp.bfloat16),
        grid=(m_pad // tile_m,),
        in_specs=in_specs,
        out_specs=pl.BlockSpec((tile_m, cp), lambda i: (i, 0)),
        compiler_params=_compiler_params(
            ("parallel",),
            tile_m * cp * 2 * (3 if has_res else 2), 2 * cp * 4),
    )(*args)


def matmul_bias_tanh(patches, w, bias, tile_m):
    m_pad, kdim = patches.shape
    cp = w.shape[1]
    return pl.pallas_call(
        _matmul_bias_tanh_kernel,
        out_shape=jax.ShapeDtypeStruct((m_pad, cp), jnp.bfloat16),
        grid=(m_pad // tile_m,),
        in_specs=[pl.BlockSpec((tile_m, kdim), lambda i: (i, 0)),
                  pl.BlockSpec((kdim, cp), lambda i: (0, 0)),
                  pl.BlockSpec((1, cp), lambda i: (0, 0))],
        out_specs=pl.BlockSpec((tile_m, cp), lambda i: (i, 0)),
        compiler_params=_compiler_params(
            ("parallel",),
            tile_m * kdim * 2, kdim * cp * 2, cp * 4, tile_m * cp * 2),
    )(patches, w, bias)


# --------------------------------------------------------------------------
# Glue: im2col, weight re-layout, BN folding, layer wrappers (plain JAX)
# --------------------------------------------------------------------------
def im2col(x, k, stride, pad, k_pad):
    """x: NHWC bf16 (channels may be zero-padded).  Column order (ki, kj, ci);
    last dim zero-padded to k_pad (multiple of 128, review #6)."""
    n, h, w, c = x.shape
    xp = jnp.pad(x, ((0, 0), (pad, pad), (pad, pad), (0, 0)))
    ho = (h + 2 * pad - k) // stride + 1
    wo = (w + 2 * pad - k) // stride + 1
    cols = [xp[:, ki:ki + stride * ho:stride, kj:kj + stride * wo:stride, :]
            for ki in range(k) for kj in range(k)]
    patches = jnp.concatenate(cols, axis=-1).reshape(n * ho * wo, k * k * c)
    if k_pad > k * k * c:
        patches = jnp.pad(patches, ((0, 0), (0, k_pad - k * k * c)))
    return patches, (n, ho, wo)


def _conv_weight_to_mat(w_pt, k, c_in_p, c_out_p, k_pad):
    """PyTorch Conv2d weight (Cout, Cin, kH, kW) -> (k_pad, c_out_p) bf16, with zero
    rows for padded input channels / padded K and zero cols for padded outputs."""
    c_out, c_in = w_pt.shape[0], w_pt.shape[1]
    assert c_in <= c_in_p and c_out <= c_out_p
    w = jnp.transpose(w_pt, (2, 3, 1, 0))                         # (k, k, Cin, Cout)
    w = jnp.pad(w, ((0, 0), (0, 0), (0, c_in_p - c_in), (0, c_out_p - c_out)))
    w = w.reshape(k * k * c_in_p, c_out_p)
    if k_pad > k * k * c_in_p:
        w = jnp.pad(w, ((0, k_pad - k * k * c_in_p), (0, 0)))
    return w.astype(jnp.bfloat16)


def _bn_scale_shift(stats, gamma, beta, count, c_pad):
    """Fold training-mode BN (biased batch var, eps=1e-5) into per-column
    scale/shift; padded channels get scale=shift=0 so they stay exactly zero."""
    c = gamma.shape[0]
    mean = stats[0] / count
    var = jnp.maximum(stats[1] / count - mean * mean, 0.0)        # clamp cancellation
    g = jnp.pad(gamma, (0, c_pad - c))
    b = jnp.pad(beta, (0, c_pad - c))
    scale = g * jax.lax.rsqrt(var + EPS)
    shift = b - mean * scale
    return scale.reshape(1, -1), shift.reshape(1, -1)


def conv_bn_relu(x, w_pt, gamma, beta, k, stride, pad):
    """x: NHWC bf16 with channels possibly zero-padded beyond the real Cin.
    Returns the channel-padded (Cp = 128-multiple) NHWC bf16 activation."""
    c_out = w_pt.shape[0]
    c_in_p = x.shape[-1]
    cp = _round_up(c_out, LANE)
    k_pad = _round_up(k * k * c_in_p, LANE)
    patches, (n, ho, wo) = im2col(x, k, stride, pad, k_pad)
    m = patches.shape[0]
    tile_m, m_pad = _choose_tile_m(m, 2 * (k_pad + cp))
    patches = _pad_rows(patches, m_pad)
    w_mat = _conv_weight_to_mat(w_pt, k, c_in_p, cp, k_pad)
    y, stats = matmul_with_stats(patches, w_mat, tile_m, m_pad)
    # padded rows are all-zero patches and pass A has no bias -> they add 0 to stats.
    scale, shift = _bn_scale_shift(stats, gamma, beta, float(m), cp)
    out = affine_act(y, scale, shift, tile_m, act="relu")
    out = out if m_pad == m else out[:m]
    return out.reshape(n, ho, wo, cp)


def res_block_relu(x, w1, g1, b1, w2, g2, b2):
    # ResBlock: h = relu(BN(conv1(x))); Generator's outer relu is fused:
    #           out = relu(h + BN(conv2(h)))
    h = conv_bn_relu(x, w1, g1, b1, 3, 1, 1)                      # (N,H,W,Cp) bf16
    n, hh, ww, cp = h.shape
    c_out = w2.shape[0]
    k_pad = _round_up(9 * cp, LANE)
    patches, _ = im2col(h, 3, 1, 1, k_pad)
    m = patches.shape[0]
    tile_m, m_pad = _choose_tile_m(m, 2 * (k_pad + 2 * cp))
    patches = _pad_rows(patches, m_pad)
    w_mat = _conv_weight_to_mat(w2, 3, cp, cp, k_pad)
    y, stats = matmul_with_stats(patches, w_mat, tile_m, m_pad)
    scale, shift = _bn_scale_shift(stats, g2, b2, float(m), cp)
    res = _pad_rows(h.reshape(m, cp), m_pad)                      # bf16, no extra pad copy
    out = affine_act(y, scale, shift, tile_m, act="relu", residual=res)
    out = out if m_pad == m else out[:m]
    return out.reshape(n, hh, ww, cp)


def tconv_bn_relu(x, w_pt, gamma, beta, k, stride, pad, out_pad):
    """ConvTranspose2d(Cin,Cout,k,stride,pad,output_padding,bias=False) + BN + ReLU via
    exact sub-pixel (phase) decomposition: one dense matmul on the un-dilated input,
    BN pooled over phases, then a pixel shuffle.  No zero rows ever feed the MXU."""
    c_in, c_out = w_pt.shape[0], w_pt.shape[1]
    n, h, w, c_in_p = x.shape
    s = stride
    assert (h - 1) * s - 2 * pad + k + out_pad == s * h, "unsupported tconv geometry"
    assert (w - 1) * s - 2 * pad + k + out_pad == s * w, "unsupported tconv geometry"

    # output phase ph takes kernel tap kh from input offset d = (ph + pad - kh) / s
    taps = {}
    offs = set()
    for ph in range(s):
        taps[ph] = []
        for kh in range(k):
            if (ph + pad - kh) % s == 0:
                d = (ph + pad - kh) // s
                taps[ph].append((kh, d))
                offs.add(d)
    dmin, dmax = min(offs), max(offs)
    win = dmax - dmin + 1
    pad_lo, pad_hi = max(0, -dmin), max(0, dmax)

    # window patches on the un-dilated input: [N*H*W, win*win*Cin_p] (order di,dj,ci)
    xp = jnp.pad(x, ((0, 0), (pad_lo, pad_hi), (pad_lo, pad_hi), (0, 0)))
    cols = [xp[:, pad_lo + dmin + di: pad_lo + dmin + di + h,
               pad_lo + dmin + dj: pad_lo + dmin + dj + w, :]
            for di in range(win) for dj in range(win)]
    k_raw = win * win * c_in_p
    k_pad = _round_up(k_raw, LANE)
    patches = jnp.concatenate(cols, axis=-1).reshape(n * h * w, k_raw)
    if k_pad > k_raw:
        patches = jnp.pad(patches, ((0, 0), (0, k_pad - k_raw)))

    # phase-major weight matrix assembled from zero-padded blocks (no scatter chain).
    cpp = _round_up(c_out, max(1, LANE // (s * s)))               # per-phase channel pad
    zero_blk = jnp.zeros((c_in_p, cpp), jnp.bfloat16)
    w_rows = []
    for di in range(win):
        dh = dmin + di
        for dj in range(win):
            dw = dmin + dj
            col_blocks = []
            for ph in range(s):
                khs = [kh for (kh, d) in taps[ph] if d == dh]
                for pw in range(s):
                    kws = [kw for (kw, d) in taps[pw] if d == dw]
                    if khs and kws:
                        blk = sum(w_pt[:, :, kh, kw] for kh in khs for kw in kws)
                        blk = jnp.pad(blk, ((0, c_in_p - c_in), (0, cpp - c_out)))
                        col_blocks.append(blk.astype(jnp.bfloat16))
                    else:
                        col_blocks.append(zero_blk)
            w_rows.append(jnp.concatenate(col_blocks, axis=1))
    w_big = jnp.concatenate(w_rows, axis=0)                       # (win*win*Cin_p, s*s*cpp)
    if k_pad > k_raw:
        w_big = jnp.pad(w_big, ((0, k_pad - k_raw), (0, 0)))

    m = patches.shape[0]
    cp_tot = s * s * cpp                                          # multiple of 128
    tile_m, m_pad = _choose_tile_m(m, 2 * (k_pad + cp_tot))
    patches = _pad_rows(patches, m_pad)
    y, stats = matmul_with_stats(patches, w_big, tile_m, m_pad)

    # pool BN statistics over the s*s phases of each channel, fold, re-broadcast.
    ps = stats.reshape(2, s * s, cpp).sum(axis=1)
    scale_c, shift_c = _bn_scale_shift(ps, gamma, beta, float(m * s * s), cpp)
    scale = jnp.tile(scale_c, (1, s * s))
    shift = jnp.tile(shift_c, (1, s * s))

    out = affine_act(y, scale, shift, tile_m, act="relu")
    out = out if m_pad == m else out[:m]
    out = out.reshape(n, h, w, s, s, cpp)
    out = out.transpose(0, 1, 3, 2, 4, 5).reshape(n, s * h, s * w, cpp)
    return out                                                     # carried channel-padded


def conv_bias_tanh(x, w_pt, bias, k, stride, pad):
    c_out = w_pt.shape[0]
    c_in_p = x.shape[-1]
    cp = _round_up(c_out, LANE)
    k_pad = _round_up(k * k * c_in_p, LANE)
    patches, (n, ho, wo) = im2col(x, k, stride, pad, k_pad)
    m = patches.shape[0]
    tile_m, m_pad = _choose_tile_m(m, 2 * (k_pad + cp))
    patches = _pad_rows(patches, m_pad)
    w_mat = _conv_weight_to_mat(w_pt, k, c_in_p, cp, k_pad)
    b = jnp.pad(bias, (0, cp - c_out)).reshape(1, -1).astype(jnp.float32)
    out = matmul_bias_tanh(patches, w_mat, b, tile_m)
    return out[:m, :c_out].reshape(n, ho, wo, c_out)


# --------------------------------------------------------------------------
# Parameter init (deterministic, mirrors Generator.__init__)
# --------------------------------------------------------------------------
def init_params(key, in_channels=3, out_channels=3, conv_dim=8):
    keys = iter(jax.random.split(key, 16))

    def convw(shape):
        return 0.02 * jax.random.normal(next(keys), shape, jnp.float32)

    def bn(c):
        g = 1.0 + 0.02 * jax.random.normal(next(keys), (c,), jnp.float32)
        return g, jnp.zeros((c,), jnp.float32)

    p = {}
    p["conv1_w"] = convw((conv_dim, in_channels, 5, 5));        p["conv1_g"], p["conv1_b"] = bn(conv_dim)
    p["conv2_w"] = convw((conv_dim * 2, conv_dim, 3, 3));       p["conv2_g"], p["conv2_b"] = bn(conv_dim * 2)
    p["conv3_w"] = convw((conv_dim * 4, conv_dim * 2, 3, 3));   p["conv3_g"], p["conv3_b"] = bn(conv_dim * 4)
    p["res_w1"] = convw((conv_dim * 4, conv_dim * 4, 3, 3));    p["res_g1"], p["res_b1"] = bn(conv_dim * 4)
    p["res_w2"] = convw((conv_dim * 4, conv_dim * 4, 3, 3));    p["res_g2"], p["res_b2"] = bn(conv_dim * 4)
    p["tconv5_w"] = convw((conv_dim * 4, conv_dim * 2, 3, 3));  p["tconv5_g"], p["tconv5_b"] = bn(conv_dim * 2)
    p["tconv6_w"] = convw((conv_dim * 2, conv_dim, 3, 3));      p["tconv6_g"], p["tconv6_b"] = bn(conv_dim)
    p["conv7_w"] = convw((out_channels, conv_dim, 5, 5))
    bound = 1.0 / (conv_dim * 5 * 5) ** 0.5    # PyTorch default Conv2d bias init range
    p["conv7_bias"] = jax.random.uniform(next(keys), (out_channels,), jnp.float32, -bound, bound)
    return p


# --------------------------------------------------------------------------
# Generator forward (I/O in NCHW, like PyTorch)
# --------------------------------------------------------------------------
@jax.jit
def generator_forward(params, x_nchw):
    x = jnp.transpose(x_nchw, (0, 2, 3, 1)).astype(jnp.bfloat16)     # NCHW -> NHWC bf16
    x = conv_bn_relu(x, params["conv1_w"], params["conv1_g"], params["conv1_b"], 5, 1, 2)
    x = conv_bn_relu(x, params["conv2_w"], params["conv2_g"], params["conv2_b"], 3, 2, 1)
    x = conv_bn_relu(x, params["conv3_w"], params["conv3_g"], params["conv3_b"], 3, 2, 1)
    x = res_block_relu(x, params["res_w1"], params["res_g1"], params["res_b1"],
                       params["res_w2"], params["res_g2"], params["res_b2"])
    x = tconv_bn_relu(x, params["tconv5_w"], params["tconv5_g"], params["tconv5_b"], 3, 2, 1, 1)
    x = tconv_bn_relu(x, params["tconv6_w"], params["tconv6_g"], params["tconv6_b"], 3, 2, 1, 1)
    x = conv_bias_tanh(x, params["conv7_w"], params["conv7_bias"], 5, 1, 2)
    return jnp.transpose(x, (0, 3, 1, 2)).astype(jnp.float32)        # NHWC -> NCHW


# --------------------------------------------------------------------------
# Pure-JAX/XLA reference (f32, HIGHEST precision) for a runtime cross-check
# --------------------------------------------------------------------------
@jax.jit
def reference_forward(params, x_nchw):
    def conv(x, w, s, p):
        return lax.conv_general_dilated(
            x, jnp.transpose(w, (2, 3, 1, 0)), (s, s), [(p, p), (p, p)],
            dimension_numbers=("NHWC", "HWIO", "NHWC"),
            precision=lax.Precision.HIGHEST)

    def tconv(x, w, s, p, op):
        k = w.shape[2]
        wf = jnp.transpose(w[:, :, ::-1, ::-1], (2, 3, 0, 1))
        lo, hi = k - 1 - p, k - 1 - p + op
        return lax.conv_general_dilated(
            x, wf, (1, 1), [(lo, hi), (lo, hi)], lhs_dilation=(s, s),
            dimension_numbers=("NHWC", "HWIO", "NHWC"),
            precision=lax.Precision.HIGHEST)

    def bn(x, g, b):
        mean = jnp.mean(x, axis=(0, 1, 2))
        var = jnp.mean((x - mean) ** 2, axis=(0, 1, 2))
        return g * (x - mean) * jax.lax.rsqrt(var + EPS) + b

    relu = lambda v: jnp.maximum(v, 0.0)
    x = jnp.transpose(x_nchw, (0, 2, 3, 1)).astype(jnp.float32)
    x = relu(bn(conv(x, params["conv1_w"], 1, 2), params["conv1_g"], params["conv1_b"]))
    x = relu(bn(conv(x, params["conv2_w"], 2, 1), params["conv2_g"], params["conv2_b"]))
    x = relu(bn(conv(x, params["conv3_w"], 2, 1), params["conv3_g"], params["conv3_b"]))
    h = relu(bn(conv(x, params["res_w1"], 1, 1), params["res_g1"], params["res_b1"]))
    x = relu(h + bn(conv(h, params["res_w2"], 1, 1), params["res_g2"], params["res_b2"]))
    x = relu(bn(tconv(x, params["tconv5_w"], 2, 1, 1), params["tconv5_g"], params["tconv5_b"]))
    x = relu(bn(tconv(x, params["tconv6_w"], 2, 1, 1), params["tconv6_g"], params["tconv6_b"]))
    x = jnp.tanh(conv(x, params["conv7_w"], 1, 2) + params["conv7_bias"])
    return jnp.transpose(x, (0, 3, 1, 2))


if __name__ == "__main__":
    key = jax.random.PRNGKey(0)

    # --- unit check: multi-tile + 2-way-split stats accumulation path ------------
    p_test = jax.random.normal(jax.random.fold_in(key, 1), (64, 256), jnp.float32).astype(jnp.bfloat16)
    w_test = jax.random.normal(jax.random.fold_in(key, 2), (256, 128), jnp.float32).astype(jnp.bfloat16)
    y_t, st_t = matmul_with_stats(p_test, w_test, tile_m=16, m_pad=64)
    y_f = jnp.dot(p_test.astype(jnp.float32), w_test.astype(jnp.float32))
    assert float(jnp.max(jnp.abs(y_t.astype(jnp.float32) - y_f))) < 0.5
    st_f = jnp.stack([y_f.sum(axis=0), (y_f * y_f).sum(axis=0)])
    assert float(jnp.max(jnp.abs(st_t - st_f))) < 2.0

    # --- full generator forward ---------------------------------------------------
    B, C_IN, H, W = 2, 3, 16, 16
    CONV_DIM = 8          # small stand-in for the default 64

    params = init_params(key, in_channels=C_IN, out_channels=3, conv_dim=CONV_DIM)
    x = jax.random.normal(jax.random.fold_in(key, 999), (B, C_IN, H, W), jnp.float32)

    y = jax.block_until_ready(generator_forward(params, x))

    assert y.shape == (B, 3, H, W), y.shape
    assert bool(jnp.all(jnp.isfinite(y)))
    assert float(jnp.max(jnp.abs(y))) <= 1.0 + 1e-6   # tanh range

    # cross-check against the pure-JAX reference (bf16 pipeline -> loose tolerance)
    y_ref = jax.block_until_ready(reference_forward(params, x))
    max_err = float(jnp.max(jnp.abs(y - y_ref)))
    assert max_err < 1e-1, f"mismatch vs reference: {max_err}"

    print("KERNEL_OK")
</pallas_src>

<mosaic_0001>
module attributes {stable_mosaic.version = 11 : i64} {
  func.func @_matmul_stats_kernel(%arg0: i32, %arg1: i32, %arg2: memref<16x256xbf16, #tpu.memory_space<vmem>>, %arg3: memref<256x128xbf16, #tpu.memory_space<vmem>>, %arg4: memref<16x128xbf16, #tpu.memory_space<vmem>>, %arg5: memref<8x128xf32, #tpu.memory_space<vmem>>) attributes {dimension_semantics = [#tpu.dimension_semantics<parallel>, #tpu.dimension_semantics<arbitrary>], iteration_bounds = array<i64: 2, 2>, scalar_prefetch = 0 : i64, scratch_operands = 0 : i64, tpu.core_type = #tpu.core_type<tc>, window_params = [{transform_indices = @transform_0, window_bounds = array<i64: 16, 256>}, {pipeline_mode = #tpu.pipeline_mode<synchronous>, transform_indices = @transform_1, window_bounds = array<i64: 256, 128>}, {transform_indices = @transform_2, window_bounds = array<i64: 16, 128>}, {transform_indices = @transform_3, window_bounds = array<i64: 8, 128>}]} {
    %c0 = arith.constant 0 : index
    %c0_0 = arith.constant 0 : index
    %0 = vector.load %arg2[%c0, %c0_0] : memref<16x256xbf16, #tpu.memory_space<vmem>>, vector<16x256xbf16>
    %c0_1 = arith.constant 0 : index
    %c0_2 = arith.constant 0 : index
    %1 = vector.load %arg3[%c0_1, %c0_2] : memref<256x128xbf16, #tpu.memory_space<vmem>>, vector<256x128xbf16>
    %cst = arith.constant dense<0.000000e+00> : vector<16x128xf32>
    %2 = tpu.matmul %0, %1, %cst {dimension_numbers = #tpu.dot_dimension_numbers<[1], [0], [0], [1], [0, 0, 1, 1], [], []>} : vector<16x256xbf16>, vector<256x128xbf16>, vector<16x128xf32> -> vector<16x128xf32>
    %3 = arith.truncf %2 : vector<16x128xf32> to vector<16x128xbf16>
    %c0_3 = arith.constant 0 : index
    %c0_4 = arith.constant 0 : index
    %4 = vector.load %arg4[%c0_3, %c0_4] : memref<16x128xbf16, #tpu.memory_space<vmem>>, vector<16x128xbf16>
    tpu.vector_store %arg4[%c0_3, %c0_4], %3 {strides = array<i32>} : memref<16x128xbf16, #tpu.memory_space<vmem>>, vector<16x128xbf16>,
    %cst_5 = arith.constant dense<0.000000e+00> : vector<128xf32>
    %5 = vector.multi_reduction <add>, %2, %cst_5 [0] : vector<16x128xf32> to vector<128xf32>
    %6 = vector.shape_cast %5 : vector<128xf32> to vector<1x128xf32>
    %7 = arith.mulf %2, %2 : vector<16x128xf32>
    %cst_6 = arith.constant dense<0.000000e+00> : vector<128xf32>
    %8 = vector.multi_reduction <add>, %7, %cst_6 [0] : vector<16x128xf32> to vector<128xf32>
    %9 = vector.shape_cast %8 : vector<128xf32> to vector<1x128xf32>
    %cst_7 = arith.constant 0.000000e+00 : f32
    %10 = vector.broadcast %cst_7 : f32 to vector<6x128xf32>
    %11 = tpu.concatenate %6, %9, %10 in 0 : vector<1x128xf32>, vector<1x128xf32>, vector<6x128xf32> -> vector<8x128xf32>
    %c0_i32 = arith.constant 0 : i32
    %12 = arith.cmpi eq, %arg1, %c0_i32 : i32
    %13 = arith.extui %12 : i1 to i32
    %c0_i32_8 = arith.constant 0 : i32
    %14 = arith.cmpi ne, %13, %c0_i32_8 : i32
    scf.if %14 {
      %c0_11 = arith.constant 0 : index
      %c0_12 = arith.constant 0 : index
      %18 = vector.load %arg5[%c0_11, %c0_12] : memref<8x128xf32, #tpu.memory_space<vmem>>, vector<8x128xf32>
      tpu.vector_store %arg5[%c0_11, %c0_12], %11 {strides = array<i32>} : memref<8x128xf32, #tpu.memory_space<vmem>>, vector<8x128xf32>,
    } else {
    }
    %c0_i32_9 = arith.constant 0 : i32
    %15 = arith.cmpi ne, %arg1, %c0_i32_9 : i32
    %16 = arith.extui %15 : i1 to i32
    %c0_i32_10 = arith.constant 0 : i32
    %17 = arith.cmpi ne, %16, %c0_i32_10 : i32
    scf.if %17 {
      %c0_11 = arith.constant 0 : index
      %c0_12 = arith.constant 0 : index
      %18 = vector.load %arg5[%c0_11, %c0_12] : memref<8x128xf32, #tpu.memory_space<vmem>>, vector<8x128xf32>
      %19 = arith.addf %18, %11 : vector<8x128xf32>
      %c0_13 = arith.constant 0 : index
      %c0_14 = arith.constant 0 : index
      %20 = vector.load %arg5[%c0_13, %c0_14] : memref<8x128xf32, #tpu.memory_space<vmem>>, vector<8x128xf32>
      tpu.vector_store %arg5[%c0_13, %c0_14], %19 {strides = array<i32>} : memref<8x128xf32, #tpu.memory_space<vmem>>, vector<8x128xf32>,
    } else {
    }
    return
  }
  func.func @transform_0(%arg0: i32, %arg1: i32) -> (i32, i32) {
    %c2_i32 = arith.constant 2 : i32
    %0 = arith.muli %arg0, %c2_i32 : i32
    %1 = arith.addi %0, %arg1 : i32
    %c0_i32 = arith.constant 0 : i32
    %c0_i32_0 = arith.constant 0 : i32
    return %1, %c0_i32 : i32, i32
  }
  func.func @transform_1(%arg0: i32, %arg1: i32) -> (i32, i32) {
    %c0_i32 = arith.constant 0 : i32
    %c0_i32_0 = arith.constant 0 : i32
    %c0_i32_1 = arith.constant 0 : i32
    return %c0_i32, %c0_i32_0 : i32, i32
  }
  func.func @transform_2(%arg0: i32, %arg1: i32) -> (i32, i32) {
    %c2_i32 = arith.constant 2 : i32
    %0 = arith.muli %arg0, %c2_i32 : i32
    %1 = arith.addi %0, %arg1 : i32
    %c0_i32 = arith.constant 0 : i32
    %c0_i32_0 = arith.constant 0 : i32
    return %1, %c0_i32 : i32, i32
  }
  func.func @transform_3(%arg0: i32, %arg1: i32) -> (i32, i32) {
    %c0_i32 = arith.constant 0 : i32
    %c0_i32_0 = arith.constant 0 : i32
    return %arg0, %c0_i32 : i32, i32
  }
}

</mosaic_0001>

<llo_original>
// kernel: tpu_custom_call.1
$region0: #{tpu_custom_call.1}
  #allocation0 [shape = 'u32[]', space=smem, size = 0x4, offset = 0x4, fixed_abs, tag = 'smem constant byte address 0x4 - core index']
  #allocation1 [shape = 'u32[144,128]{1,0:T(1,128)}', space=vmem, size = 0x12000, scoped, tag = 'internal scratch']
  %s0 = inlined_call_operand.hbm [shape: bf16[64,256], index: 0, kind: input, shape index: {}]
  %s1 = inlined_call_operand.hbm [shape: bf16[256,128], index: 1, kind: input, shape index: {}]
  %s2 = inlined_call_operand.hbm [shape: bf16[64,128], index: 2, kind: output, shape index: {0}]
  %s3 = inlined_call_operand.hbm [shape: f32[16,128], index: 3, kind: output, shape index: {1}]
  %4 = xla_tuple %s2, %s3
  %s5 = sld [smem:[#allocation0]]
  $region65: #{tpu_custom_call.1} parent=0
    _
  %s7 = ssub.s32 1, %s5
  %s8 = scalar_select 0, %s7, %s5
  $region1: #{tpu_custom_call.1} parent=0
    #allocation2 [shape = 'u8[16384]{0}', space=vmem, size = 0x4000, scoped, tag = 'input window, operand 0']
    #allocation3 [shape = 's32[2]{0}', space=sflag, size = 0x8, scoped, tag = 'scoped memory for tpu_custom_call.1']
    #allocation4 [shape = 's32[2]{0}', space=sflag, size = 0x8, scoped, tag = 'scoped memory for tpu_custom_call.1']
    #allocation5 [shape = 'u8[65536]{0}', space=vmem, size = 0x10000, scoped, tag = 'input window, operand 1, single buffered']
    #allocation6 [shape = 's32[1]{0}', space=sflag, size = 0x4, scoped, tag = 'scoped memory for tpu_custom_call.1']
    #allocation7 [shape = 'u8[8192]{0}', space=vmem, size = 0x2000, scoped, tag = 'output window, operand 0']
    #allocation8 [shape = 'u8[8192]{0}', space=vmem, size = 0x2000, scoped, tag = 'output window, operand 1']
    #allocation9 [shape = 's32[2]{0}', space=sflag, size = 0x8, scoped, tag = 'scoped memory for tpu_custom_call.1']
    %9 = vsyncpa [#allocation3], 0
    %s10 = scalar_lea.sflag [#allocation3], 1
    %11 = vsyncpa %s10, 0
    %12 = vsyncpa [#allocation6], 0
    %13 = vsyncpa [#allocation4], 0
    %s14 = scalar_lea.sflag [#allocation4], 1
    %15 = vsyncpa %s14, 0
    %16 = vsyncpa [#allocation9], 0
    %s17 = scalar_lea.sflag [#allocation9], 1
    %18 = vsyncpa %s17, 0
    loop: start=0, step=1, limit=6
    $region2: #{tpu_custom_call.1} parent=1 // loop_pre_header
      _
    $region3: #{tpu_custom_call.1} parent=1 // loop_header
      %s20 = sphi 0, %s24
      %p21 = scmp.ge.s32.totalorder %s20, 6
      %s27 = sphi 0, %s39
      %s28 = sphi 0, %s35
      %s29 = sphi 0, %s27
      %s30 = sphi 0, %s28
      %s31 = sphi 0, %s29
      %s32 = sphi 0, %s30
      %s46 = sphi 0, %s48
      %s49 = sphi 0, %s46
      %s50 = sphi 0, %s49
      %s66 = sphi 0, %s50
      %s70 = sphi 0, %s70
      %s72 = sphi 0, %s70
      %s73 = sphi 0, %s72
      %s87 = sphi 0, %s73
      %s97 = sphi 0, %s99
      %s100 = sphi 0, %s97
      %s101 = sphi 0, %s100
      %s117 = sphi 0, %s101
      %s123 = sphi 0, %s125
      %s126 = sphi 0, %s123
      %s127 = sphi 0, %s126
      %s143 = sphi 0, %s127
    $region4: #{tpu_custom_call.1} parent=1 // loop_header_branch
      %23 = sbr.rel (%p21) target = $region8
    $region5: #{tpu_custom_call.1} parent=1 // loop_body
      %s25 = ssub.s32 %s20, 1
      %s26 = ssub.s32 %s20, 2
      %s33 = sadd.s32 1, %s28
      %p34 = scmp.ge.s32.totalorder %s33, 2
      %s35 = scalar_select %p34, 0, %s33
      %s36 = sadd.s32 1, %s27
      %s37 = scalar_select %p34, %s36, %s27
      %p38 = scmp.ge.s32.totalorder %s37, 2
      %s39 = scalar_select %p38, 0, %s37
      %s40 = smul.u32 %s27, 2
      %s41 = sadd.s32 %s40, %s28
      %s42 = smul.u32 %s39, 2
      %s43 = sadd.s32 %s42, %s35
      %s44 = ssub.s32 %s41, %s43
      %p45 = scmp.eq.s32.totalorder %s44, 0
      %s47 = sadd.s32 %s46, 1
      %s48 = scalar_select %p45, %s46, %s47
      %p51 = pneg %p45
      %p52 = scmp.eq.s32.totalorder %s20, 3
      %p53 = por %p51, %p52
      %p54 = scmp.ne.s32.totalorder %s46, %s49
      %p55 = scmp.eq.s32.totalorder %s20, 0
      %p56 = por %p54, %p55
      %p57 = scmp.ne.s32.totalorder %s46, %s49
      %p58 = scmp.eq.s32.totalorder %s25, 3
      %p59 = por %p57, %p58
      %p60 = scmp.ne.s32.totalorder %s49, %s50
      %p61 = scmp.eq.s32.totalorder %s25, 0
      %p62 = por %p60, %p61
      %p63 = scmp.ne.s32.totalorder %s49, %s50
      %p64 = scmp.eq.s32.totalorder %s26, 3
      %p65 = por %p63, %p64
      %p67 = scmp.ne.s32.totalorder %s50, %s66
      %p68 = scmp.eq.s32.totalorder %s26, 0
      %p69 = por %p67, %p68
      %s71 = sadd.s32 %s70, 1
      %p74 = scmp.eq.s32.totalorder %s20, 3
      %p75 = scmp.ne.s32.totalorder %s70, %s72
      %p76 = scmp.eq.s32.totalorder %s20, 0
      %p77 = por %p75, %p76
      %p78 = scmp.ne.s32.totalorder %s70, %s72
      %p79 = scmp.eq.s32.totalorder %s25, 3
      %p80 = por %p78, %p79
      %p81 = scmp.ne.s32.totalorder %s72, %s73
      %p82 = scmp.eq.s32.totalorder %s25, 0
      %p83 = por %p81, %p82
      %p84 = scmp.ne.s32.totalorder %s72, %s73
      %p85 = scmp.eq.s32.totalorder %s26, 3
      %p86 = por %p84, %p85
      %p88 = scmp.ne.s32.totalorder %s73, %s87
      %p89 = scmp.eq.s32.totalorder %s26, 0
      %p90 = por %p88, %p89
      %s91 = smul.u32 %s27, 2
      %s92 = sadd.s32 %s91, %s28
      %s93 = smul.u32 %s39, 2
      %s94 = sadd.s32 %s93, %s35
      %s95 = ssub.s32 %s92, %s94
      %p96 = scmp.eq.s32.totalorder %s95, 0
      %s98 = sadd.s32 %s97, 1
      %s99 = scalar_select %p96, %s97, %s98
      %p102 = pneg %p96
      %p103 = scmp.eq.s32.totalorder %s20, 3
      %p104 = por %p102, %p103
      %p105 = scmp.ne.s32.totalorder %s97, %s100
      %p106 = scmp.eq.s32.totalorder %s20, 0
      %p107 = por %p105, %p106
      %p108 = scmp.ne.s32.totalorder %s97, %s100
      %p109 = scmp.eq.s32.totalorder %s25, 3
      %p110 = por %p108, %p109
      %p111 = scmp.ne.s32.totalorder %s100, %s101
      %p112 = scmp.eq.s32.totalorder %s25, 0
      %p113 = por %p111, %p112
      %p114 = scmp.ne.s32.totalorder %s100, %s101
      %p115 = scmp.eq.s32.totalorder %s26, 3
      %p116 = por %p114, %p115
      %p118 = scmp.ne.s32.totalorder %s101, %s117
      %p119 = scmp.eq.s32.totalorder %s26, 0
      %p120 = por %p118, %p119
      %s121 = ssub.s32 %s27, %s39
      %p122 = scmp.eq.s32.totalorder %s121, 0
      %s124 = sadd.s32 %s123, 1
      %s125 = scalar_select %p122, %s123, %s124
      %p128 = pneg %p122
      %p129 = scmp.eq.s32.totalorder %s20, 3
      %p130 = por %p128, %p129
      %p131 = scmp.ne.s32.totalorder %s123, %s126
      %p132 = scmp.eq.s32.totalorder %s20, 0
      %p133 = por %p131, %p132
      %p134 = scmp.ne.s32.totalorder %s123, %s126
      %p135 = scmp.eq.s32.totalorder %s25, 3
      %p136 = por %p134, %p135
      %p137 = scmp.ne.s32.totalorder %s126, %s127
      %p138 = scmp.eq.s32.totalorder %s25, 0
      %p139 = por %p137, %p138
      %p140 = scmp.ne.s32.totalorder %s126, %s127
      %p141 = scmp.eq.s32.totalorder %s26, 3
      %p142 = por %p140, %p141
      %p144 = scmp.ne.s32.totalorder %s127, %s143
      %p145 = scmp.eq.s32.totalorder %s26, 0
      %p146 = por %p144, %p145
      %p147 = scmp.le.s32.totalorder 1, %s20
      %p148 = scmp.lt.s32.totalorder %s20, 5
      %p149 = pnand %p147, %p148
      %p150 = pneg %p149
      // Predicated region
      $region9: #{tpu_custom_call.1} parent=5 // pred_check
        _
      $region10: #{tpu_custom_call.1} parent=5 // pred_check_branch
        %152 = sbr.rel (%p149) target = $region12
      $region11: #{tpu_custom_call.1} parent=5 // pred_region
        %s153 = ssub.s32 %s20, 1
        // Predicated region
        $region13: #{tpu_custom_call.1} parent=11 // pred_check
          %p154 = pneg %p83
        $region14: #{tpu_custom_call.1} parent=11 // pred_check_branch
          %156 = sbr.rel (%p154) target = $region16
        $region15: #{tpu_custom_call.1} parent=11 // pred_region
          %s158 = ssub.s32 2048, 2048
          %159 = vsyncadd [#allocation6], %s158
          %s160 = sshll.u32 [#allocation5], 4
          %s161 = int_to_ptr.vmem [resolvable:$true] %s160
          %166 = dma.hbm_to_vmem [thread:$0]  %s1, 2048, %s161, [#allocation6], 64, 64, 4
        $region16: #{tpu_custom_call.1} parent=11 // pred_fallthru
          _
      $region12: #{tpu_custom_call.1} parent=5 // pred_fallthru
        _
      %p167 = scmp.lt.s32.totalorder %s20, 4
      // Predicated region
      $region17: #{tpu_custom_call.1} parent=5 // pred_check
        %p168 = pneg %p167
      $region18: #{tpu_custom_call.1} parent=5 // pred_check_branch
        %170 = sbr.rel (%p168) target = $region20
      $region19: #{tpu_custom_call.1} parent=5 // pred_region
        // Predicated region
        $region21: #{tpu_custom_call.1} parent=19 // pred_check
          %p171 = pneg %p56
        $region22: #{tpu_custom_call.1} parent=19 // pred_check_branch
          %173 = sbr.rel (%p171) target = $region24
        $region23: #{tpu_custom_call.1} parent=19 // pred_region
          %s174 = sand.u32 %s46, 1
          %s175 = scalar_lea.sflag [#allocation3], %s174
          %s176 = sand.u32 %s46, 1
          %s177 = smul.addr %s176, 16
          %s178 = scalar_lea.vmem [#allocation2], %s177
          %s179 = smul.u32 %s27, 2
          %s180 = sadd.s32 %s179, %s28
          %s181 = smul.u32 2, %s180
          %s183 = ssub.s32 256, 256
          %184 = vsyncadd %s175, %s183
          %s185 = smul.addr %s181, 2
          %s186 = smul.addr %s185, 64
          %s187 = scalar_lea.hbm %s0, %s186
          %s188 = sshll.u32 %s178, 4
          %s189 = int_to_ptr.vmem [resolvable:$true] %s188
          %194 = dma.hbm_to_vmem [thread:$0]  %s187, 256, %s189, %s175, 128, 128, 8
        $region24: #{tpu_custom_call.1} parent=19 // pred_fallthru
          _
      $region20: #{tpu_custom_call.1} parent=5 // pred_fallthru
        _
      %p195 = scmp.le.s32.totalorder 1, %s20
      %p196 = scmp.lt.s32.totalorder %s20, 5
      %p197 = pnand %p195, %p196
      %p198 = pneg %p197
      // Predicated region
      $region25: #{tpu_custom_call.1} parent=5 // pred_check
        _
      $region26: #{tpu_custom_call.1} parent=5 // pred_check_branch
        %200 = sbr.rel (%p197) target = $region28
      $region27: #{tpu_custom_call.1} parent=5 // pred_region
        %s201 = ssub.s32 %s20, 1
        %s202 = sand.u32 %s49, 1
        %s203 = scalar_lea.sflag [#allocation3], %s202
        %s204 = sand.u32 %s49, 1
        %s205 = smul.addr %s204, 16
        %s206 = scalar_lea.vmem [#allocation2], %s205
        // Predicated region
        $region29: #{tpu_custom_call.1} parent=27 // pred_check
          %p207 = pneg %p62
        $region30: #{tpu_custom_call.1} parent=27 // pred_check_branch
          %209 = sbr.rel (%p207) target = $region32
        $region31: #{tpu_custom_call.1} parent=27 // pred_region
          %210 = dma.done %s203, 256
        $region32: #{tpu_custom_call.1} parent=27 // pred_fallthru
          _
        // Predicated region
        $region33: #{tpu_custom_call.1} parent=27 // pred_check
          %p211 = pneg %p83
        $region34: #{tpu_custom_call.1} parent=27 // pred_check_branch
          %213 = sbr.rel (%p211) target = $region36
        $region35: #{tpu_custom_call.1} parent=27 // pred_region
          %214 = dma.done [#allocation6], 2048
        $region36: #{tpu_custom_call.1} parent=27 // pred_fallthru
          _
        %s215 = sand.u32 %s49, 1
        %s216 = scalar_lea.sflag [#allocation3], %s215
        %s217 = sand.u32 %s49, 1
        %s218 = smul.addr %s217, 16
        %s219 = scalar_lea.vmem [#allocation2], %s218
        %p220 = pneg %p62
        %p221 = pneg %p59
        %p222 = pneg %p83
        %p223 = pneg %p80
        %p224 = pneg %p113
        %p225 = pneg %p110
        %s226 = sand.u32 %s100, 1
        %s227 = scalar_lea.sflag [#allocation4], %s226
        %s228 = sand.u32 %s100, 1
        %s229 = smul.addr %s228, 8
        %s230 = scalar_lea.vmem [#allocation7], %s229
        %p231 = pneg %p139
        %p232 = pneg %p136
        %s233 = sand.u32 %s126, 1
        %s234 = scalar_lea.sflag [#allocation9], %s233
        %s235 = sand.u32 %s126, 1
        %s236 = smul.addr %s235, 8
        %s237 = scalar_lea.vmem [#allocation8], %s236
        %s238 = smul.u32 %s29, 2
        %s239 = sadd.s32 %s238, %s30
        %s240 = smul.u32 2, %s239
        %s241 = smul.u32 %s29, 2
        %s242 = sadd.s32 %s241, %s30
        %s243 = smul.u32 2, %s242
        %v245 = vld [vmem:[%s206] sm:$0xff]
        %v246 = vld [vmem:[%s206 + $0x8] sm:$0xff]
        %v247 = vld [vmem:[#allocation5] sm:$0xf]
        %v248 = vld [vmem:[#allocation5 + $0x4] sm:$0xf]
        %v249 = vld [vmem:[#allocation5 + $0x8] sm:$0xf]
        %v250 = vld [vmem:[#allocation5 + $0xc] sm:$0xf]
        %v251 = vld [vmem:[#allocation5 + $0x10] sm:$0xf]
        %v252 = vld [vmem:[#allocation5 + $0x14] sm:$0xf]
        %v253 = vld [vmem:[#allocation5 + $0x18] sm:$0xf]
        %v254 = vld [vmem:[#allocation5 + $0x1c] sm:$0xf]
        %v255 = vld [vmem:[#allocation5 + $0x20] sm:$0xf]
        %v256 = vld [vmem:[#allocation5 + $0x24] sm:$0xf]
        %v257 = vld [vmem:[#allocation5 + $0x28] sm:$0xf]
        %v258 = vld [vmem:[#allocation5 + $0x2c] sm:$0xf]
        %v259 = vld [vmem:[#allocation5 + $0x30] sm:$0xf]
        %v260 = vld [vmem:[#allocation5 + $0x34] sm:$0xf]
        %v261 = vld [vmem:[#allocation5 + $0x38] sm:$0xf]
        %v262 = vld [vmem:[#allocation5 + $0x3c] sm:$0xf]
        %v263 = vld [vmem:[#allocation5 + $0x40] sm:$0xf]
        %v264 = vld [vmem:[#allocation5 + $0x44] sm:$0xf]
        %v265 = vld [vmem:[#allocation5 + $0x48] sm:$0xf]
        %v266 = vld [vmem:[#allocation5 + $0x4c] sm:$0xf]
        %v267 = vld [vmem:[#allocation5 + $0x50] sm:$0xf]
        %v268 = vld [vmem:[#allocation5 + $0x54] sm:$0xf]
        %v269 = vld [vmem:[#allocation5 + $0x58] sm:$0xf]
        %v270 = vld [vmem:[#allocation5 + $0x5c] sm:$0xf]
        %v271 = vld [vmem:[#allocation5 + $0x60] sm:$0xf]
        %v272 = vld [vmem:[#allocation5 + $0x64] sm:$0xf]
        %v273 = vld [vmem:[#allocation5 + $0x68] sm:$0xf]
        %v274 = vld [vmem:[#allocation5 + $0x6c] sm:$0xf]
        %v275 = vld [vmem:[#allocation5 + $0x70] sm:$0xf]
        %v276 = vld [vmem:[#allocation5 + $0x74] sm:$0xf]
        %v277 = vld [vmem:[#allocation5 + $0x78] sm:$0xf]
        %v278 = vld [vmem:[#allocation5 + $0x7c] sm:$0xf]
        %v281 = vunpack.c.l.b16 %v245
        %v282 = vunpack.c.h.b16 %v245
        %v283 = vunpack.c.l.b16 %v246
        %v284 = vunpack.c.h.b16 %v246
        %v285 = vpack.c.b16 %v283, %v281
        %v286 = vpack.c.b16 %v284, %v282
        %v321 = vunpack.c.l.b16 %v247
        %v322 = vunpack.c.l.b16 %v248
        %v323 = vunpack.c.l.b16 %v249
        %v324 = vunpack.c.l.b16 %v250
        %v325 = vunpack.c.l.b16 %v251
        %v326 = vunpack.c.l.b16 %v252
        %v327 = vunpack.c.l.b16 %v253
        %v328 = vunpack.c.l.b16 %v254
        %v329 = vunpack.c.l.b16 %v255
        %v330 = vunpack.c.l.b16 %v256
        %v331 = vunpack.c.l.b16 %v257
        %v332 = vunpack.c.l.b16 %v258
        %v333 = vunpack.c.l.b16 %v259
        %v334 = vunpack.c.l.b16 %v260
        %v335 = vunpack.c.l.b16 %v261
        %v336 = vunpack.c.l.b16 %v262
        %v337 = vunpack.c.l.b16 %v263
        %v338 = vunpack.c.l.b16 %v264
        %v339 = vunpack.c.l.b16 %v265
        %v340 = vunpack.c.l.b16 %v266
        %v341 = vunpack.c.l.b16 %v267
        %v342 = vunpack.c.l.b16 %v268
        %v343 = vunpack.c.l.b16 %v269
        %v344 = vunpack.c.l.b16 %v270
        %v345 = vunpack.c.l.b16 %v271
        %v346 = vunpack.c.l.b16 %v272
        %v347 = vunpack.c.l.b16 %v273
        %v348 = vunpack.c.l.b16 %v274
        %v349 = vunpack.c.l.b16 %v275
        %v350 = vunpack.c.l.b16 %v276
        %v351 = vunpack.c.l.b16 %v277
        %v352 = vunpack.c.l.b16 %v278
        %v353 = vpack.c.b16 %v322, %v321
        %v354 = vpack.c.b16 %v324, %v323
        %v355 = vpack.c.b16 %v326, %v325
        %v356 = vpack.c.b16 %v328, %v327
        %v357 = vpack.c.b16 %v330, %v329
        %v358 = vpack.c.b16 %v332, %v331
        %v359 = vpack.c.b16 %v334, %v333
        %v360 = vpack.c.b16 %v336, %v335
        %v361 = vpack.c.b16 %v338, %v337
        %v362 = vpack.c.b16 %v340, %v339
        %v363 = vpack.c.b16 %v342, %v341
        %v364 = vpack.c.b16 %v344, %v343
        %v365 = vpack.c.b16 %v346, %v345
        %v366 = vpack.c.b16 %v348, %v347
        %v367 = vpack.c.b16 %v350, %v349
        %v368 = vpack.c.b16 %v352, %v351
        %385 = vmatprep.subr.bf16.mxu0 0
        %386 = vmatpush1.bf16.msra.mxu0 %v353
        %387 = vmatprep.subr.bf16.mxu0 0
        %388 = vmatpush1.bf16.msra.mxu0 %v354
        %389 = vmatprep.subr.bf16.mxu0 0
        %390 = vmatpush1.bf16.msra.mxu0 %v355
        %391 = vmatprep.subr.bf16.mxu0 0
        %392 = vmatpush1.bf16.msra.mxu0 %v356
        %393 = vmatprep.subr.bf16.mxu0 0
        %394 = vmatpush1.bf16.msra.mxu0 %v357
        %395 = vmatprep.subr.bf16.mxu0 0
        %396 = vmatpush1.bf16.msra.mxu0 %v358
        %397 = vmatprep.subr.bf16.mxu0 0
        %398 = vmatpush1.bf16.msra.mxu0 %v359
        %399 = vmatprep.subr.bf16.mxu0 0
        %400 = vmatpush1.bf16.msra.mxu0 %v360
        %401 = vmatprep.subr.bf16.mxu0 0
        %402 = vmatpush1.bf16.msra.mxu0 %v361
        %403 = vmatprep.subr.bf16.mxu0 0
        %404 = vmatpush1.bf16.msra.mxu0 %v362
        %405 = vmatprep.subr.bf16.mxu0 0
        %406 = vmatpush1.bf16.msra.mxu0 %v363
        %407 = vmatprep.subr.bf16.mxu0 0
        %408 = vmatpush1.bf16.msra.mxu0 %v364
        %409 = vmatprep.subr.bf16.mxu0 0
        %410 = vmatpush1.bf16.msra.mxu0 %v365
        %411 = vmatprep.subr.bf16.mxu0 0
        %412 = vmatpush1.bf16.msra.mxu0 %v366
        %413 = vmatprep.subr.bf16.mxu0 0
        %414 = vmatpush1.bf16.msra.mxu0 %v367
        %415 = vmatprep.subr.bf16.mxu0 0
        %416 = vmatpush1.bf16.msra.mxu0 %v368
        %417 = vmatprep.mubr.bf16.mxu0 %v286
        %418 = vmatmul.mubr.bf16.gmra.mrb[0].mxu0 %v285
        %v419 = vpop.f32.mrb[0].mxu0
        %v420 = vadd.f32 0.0, %v419
        %v421 = vpop.f32.mrb[0].mxu0
        %v422 = vpop.f32.mrb[0].mxu0
        %v423 = vadd.f32 0.0, %v422
        %v424 = vpop.f32.mrb[0].mxu0
        %425 = vdwg.mxu0
        %v426 = vpack.c.bf16 %v423, %v420
        %v428 = vunpack.c.l.b16 %v426
        %v429 = vunpack.c.h.b16 %v426
        %v430 = vpack.c.b16 %v428, %v428
        %v431 = vpack.c.b16 %v429, %v429
        %434 = vst [vmem:[%s230] sm:$0xf] %v430
        %435 = vst [vmem:[%s230 + $0x4] sm:$0xf] %v431
        %v436 = vadd.f32 %v420, %v423
        %v437 = vrot.slane %v436, 4
        %v438 = vadd.f32 %v436, %v437
        %v439 = vrot.slane %v438, 2
        %v440 = vadd.f32 %v438, %v439
        %v441 = vrot.slane %v440, 1
        %v442 = vadd.f32 %v440, %v441
        %v443 = vmul.f32 %v420, %v420
        %v444 = vmul.f32 %v423, %v423
        %v445 = vadd.f32 %v443, %v444
        %v446 = vrot.slane %v445, 4
        %v447 = vadd.f32 %v445, %v446
        %v448 = vrot.slane %v447, 2
        %v449 = vadd.f32 %v447, %v448
        %v450 = vrot.slane %v449, 1
        %v451 = vadd.f32 %v449, %v450
        %vm452 = vcmask 1040384
        %v453 = vsel %vm452, %v442, %v451
        %vm454 = vcmask 1041408
        %v455 = vsel %vm454, %v453, 0.0
        %p456 = scmp.eq.s32.totalorder %s30, 0
        // Predicated region
        $region37: #{tpu_custom_call.1} parent=27 // pred_check
          %p457 = pneg %p456
        $region38: #{tpu_custom_call.1} parent=27 // pred_check_branch
          %459 = sbr.rel (%p457) target = $region40
        $region39: #{tpu_custom_call.1} parent=27 // pred_region
          %460 = vst [vmem:[%s237] sm:$0xff] %v455
        $region40: #{tpu_custom_call.1} parent=27 // pred_fallthru
          _
        %p461 = scmp.ne.s32.totalorder %s30, 0
        // Predicated region
        $region41: #{tpu_custom_call.1} parent=27 // pred_check
          %p462 = pneg %p461
        $region42: #{tpu_custom_call.1} parent=27 // pred_check_branch
          %464 = sbr.rel (%p462) target = $region44
        $region43: #{tpu_custom_call.1} parent=27 // pred_region
          %v465 = vld [vmem:[%s237] sm:$0xff]
          %v466 = vadd.f32 %v465, %v455
          %467 = vst [vmem:[%s237] sm:$0xff] %v466
        $region44: #{tpu_custom_call.1} parent=27 // pred_fallthru
          _
        %s468 = sand.u32 %s100, 1
        %s469 = scalar_lea.sflag [#allocation4], %s468
        %s470 = sand.u32 %s100, 1
        %s471 = smul.addr %s470, 8
        %s472 = scalar_lea.vmem [#allocation7], %s471
        %s473 = sand.u32 %s126, 1
        %s474 = scalar_lea.sflag [#allocation9], %s473
        %s475 = sand.u32 %s126, 1
        %s476 = smul.addr %s475, 8
        %s477 = scalar_lea.vmem [#allocation8], %s476
        // Predicated region
        $region45: #{tpu_custom_call.1} parent=27 // pred_check
          %p478 = pneg %p110
        $region46: #{tpu_custom_call.1} parent=27 // pred_check_branch
          %480 = sbr.rel (%p478) target = $region48
        $region47: #{tpu_custom_call.1} parent=27 // pred_region
          %s481 = smul.u32 %s29, 2
          %s482 = sadd.s32 %s481, %s30
          %s483 = smul.u32 2, %s482
          %s485 = ssub.s32 128, 128
          %486 = vsyncadd %s469, %s485
          %s487 = smul.addr %s483, 64
          %s488 = scalar_lea.hbm %s2, %s487
          %s489 = sshll.u32 %s472, 4
          %s490 = int_to_ptr.vmem [resolvable:$true] %s489
          %495 = dma.vmem_to_hbm [thread:$0]  %s490, 128, %s488, %s469, 64, 64, 4
        $region48: #{tpu_custom_call.1} parent=27 // pred_fallthru
          _
        // Predicated region
        $region49: #{tpu_custom_call.1} parent=27 // pred_check
          %p496 = pneg %p136
        $region50: #{tpu_custom_call.1} parent=27 // pred_check_branch
          %498 = sbr.rel (%p496) target = $region52
        $region51: #{tpu_custom_call.1} parent=27 // pred_region
          %s500 = ssub.s32 128, 128
          %501 = vsyncadd %s474, %s500
          %s502 = smul.addr %s29, 128
          %s503 = scalar_lea.hbm %s3, %s502
          %s505 = sshll.u32 %s477, 4
          %s506 = int_to_ptr.vmem [resolvable:$true] %s505
          %508 = dma.vmem_to_hbm [thread:$0]  %s506, 128, %s503, %s474
        $region52: #{tpu_custom_call.1} parent=27 // pred_fallthru
          _
      $region28: #{tpu_custom_call.1} parent=5 // pred_fallthru
        _
      %p509 = scmp.le.s32.totalorder 2, %s20
      // Predicated region
      $region53: #{tpu_custom_call.1} parent=5 // pred_check
        %p510 = pneg %p509
      $region54: #{tpu_custom_call.1} parent=5 // pred_check_branch
        %512 = sbr.rel (%p510) target = $region56
      $region55: #{tpu_custom_call.1} parent=5 // pred_region
        %s513 = ssub.s32 %s20, 2
        // Predicated region
        $region57: #{tpu_custom_call.1} parent=55 // pred_check
          %p514 = pneg %p116
        $region58: #{tpu_custom_call.1} parent=55 // pred_check_branch
          %516 = sbr.rel (%p514) target = $region60
        $region59: #{tpu_custom_call.1} parent=55 // pred_region
          %s517 = sand.u32 %s101, 1
          %s518 = scalar_lea.sflag [#allocation4], %s517
          %s519 = sand.u32 %s101, 1
          %s520 = smul.addr %s519, 8
          %s521 = scalar_lea.vmem [#allocation7], %s520
          %522 = dma.done %s518, 128
        $region60: #{tpu_custom_call.1} parent=55 // pred_fallthru
          _
        // Predicated region
        $region61: #{tpu_custom_call.1} parent=55 // pred_check
          %p523 = pneg %p142
        $region62: #{tpu_custom_call.1} parent=55 // pred_check_branch
          %525 = sbr.rel (%p523) target = $region64
        $region63: #{tpu_custom_call.1} parent=55 // pred_region
          %s526 = sand.u32 %s127, 1
          %s527 = scalar_lea.sflag [#allocation9], %s526
          %s528 = sand.u32 %s127, 1
          %s529 = smul.addr %s528, 8
          %s530 = scalar_lea.vmem [#allocation8], %s529
          %531 = dma.done %s527, 128
        $region64: #{tpu_custom_call.1} parent=55 // pred_fallthru
          _
      $region56: #{tpu_custom_call.1} parent=5 // pred_fallthru
        _
    $region6: #{tpu_custom_call.1} parent=1 // loop_footer
      %s24 = sadd.s32 1, %s20
    $region7: #{tpu_custom_call.1} parent=1 // loop_footer_branch
      %19 = sbr.rel target = $region3
    $region8: #{tpu_custom_call.1} parent=1 // loop_exit
      _
    %532 = vsyncpa [#allocation3], 1
    %s533 = scalar_lea.sflag [#allocation3], 1
    %534 = vsyncpa %s533, 1
    %535 = vsyncpa [#allocation6], 1
    %536 = vsyncpa [#allocation4], 1
    %s537 = scalar_lea.sflag [#allocation4], 1
    %538 = vsyncpa %s537, 1
    %539 = vsyncpa [#allocation9], 1
    %s540 = scalar_lea.sflag [#allocation9], 1
    %541 = vsyncpa %s540, 1

</llo_original>
